<compile_context>
chip_gen: v5e
topology: v5e:2x2
jax: 0.10.0
libtpu: 0.0.40
codegen_flags: <defaults>
</compile_context>

<pallas_src>
import math
from functools import partial

import jax
import jax.numpy as jnp
from jax.experimental import pallas as pl
from jax.experimental.pallas import tpu as pltpu


def _sdgcn_kernel(x_ref, a_ref, wg_ref, g_ref, b_ref, o_ref, *, d, ln_eps):
    # x_ref: (TG, N, d)  a_ref: (N, N)  wg_ref: (d, d)  g_ref/b_ref: (1, d)
    x = x_ref[...]                                        # f32 (TG, N, d)
    tg = x.shape[0]
    xb = x.astype(jnp.bfloat16)                           # MXU operands in bf16

    # St = softmax(X X^T, -1) / sqrt(d + 1e-8)
    # TODO(synk): nn.Dropout(p=0.0) on St is identity; nonzero p would need
    #             pltpu.prng_seed/prng_random_bits here.
    s = jnp.einsum("gnd,gmd->gnm", xb, xb, preferred_element_type=jnp.float32)
    s = s - jnp.max(s, axis=-1, keepdims=True)
    p = jnp.exp(s)
    st = p * pl.reciprocal(jnp.sum(p, axis=-1, keepdims=True), approx=True)
    st = st * (1.0 / math.sqrt(d + 1e-8))

    # GCN: relu( (A * St) @ X @ Wg ), then / sqrt(d + 1e-9)
    a_eff = (a_ref[...] * st).astype(jnp.bfloat16)        # (TG, N, N)
    ax = jnp.einsum("gnm,gmd->gnd", a_eff, xb,
                    preferred_element_type=jnp.float32)   # (TG, N, d)
    wg = jnp.broadcast_to(wg_ref[...].astype(jnp.bfloat16)[None], (tg, d, d))
    h = jnp.einsum("gnd,gde->gne", ax.astype(jnp.bfloat16), wg,
                   preferred_element_type=jnp.float32)    # (TG, N, d)
    h = jnp.maximum(h, 0.0) * (1.0 / math.sqrt(d + 1e-9))

    # LayerNorm over d (f32 VPU math), then residual + X
    mu = jnp.mean(h, axis=-1, keepdims=True)
    var = jnp.mean((h - mu) ** 2, axis=-1, keepdims=True)
    hn = (h - mu) * jax.lax.rsqrt(var + ln_eps)
    o_ref[...] = hn * g_ref[...] + b_ref[...] + x


def sdgcn_forward(X, A, Wg, gamma, beta, *, tg=None, ln_eps=1e-5):
    """SDGCN_with_ln_res_scaled forward.  X:(b,T,N,d), A:(N,N), Wg:(d,d)."""
    b, T, N, d = X.shape
    G = b * T
    if tg is None:  # batch several (b,t) groups per grid step; keep >=2 steps
        tg = next(t for t in (8, 4, 2, 1) if G % t == 0)
    xs = X.reshape(G, N, d)
    out = pl.pallas_call(
        partial(_sdgcn_kernel, d=d, ln_eps=ln_eps),
        out_shape=jax.ShapeDtypeStruct((G, N, d), jnp.float32),
        grid=(G // tg,),
        in_specs=[pl.BlockSpec((tg, N, d), lambda i: (i, 0, 0)),
                  pl.BlockSpec((N, N), lambda i: (0, 0)),
                  pl.BlockSpec((d, d), lambda i: (0, 0)),
                  pl.BlockSpec((1, d), lambda i: (0, 0)),
                  pl.BlockSpec((1, d), lambda i: (0, 0))],
        out_specs=pl.BlockSpec((tg, N, d), lambda i: (i, 0, 0)),
        compiler_params=pltpu.CompilerParams(
            dimension_semantics=("parallel",)),
    )(xs, A, Wg, gamma, beta)
    return out.reshape(b, T, N, d)


def sdgcn_reference(X, A, Wg, gamma, beta, ln_eps=1e-5):
    """Pure-JAX f32 reference mirroring the PyTorch forward."""
    d = X.shape[-1]
    St = jax.nn.softmax(jnp.einsum("btnd,btmd->btnm", X, X), axis=-1)
    St = St / math.sqrt(d + 1e-8)
    ax = jnp.einsum("btnm,btmd->btnd", A * St, X)
    h = jax.nn.relu(ax @ Wg) / math.sqrt(d + 1e-9)
    mu = jnp.mean(h, axis=-1, keepdims=True)
    var = jnp.mean((h - mu) ** 2, axis=-1, keepdims=True)
    hn = (h - mu) / jnp.sqrt(var + ln_eps)
    return hn * gamma.reshape(1, 1, 1, d) + beta.reshape(1, 1, 1, d) + X


if __name__ == "__main__":
    b, T, N, d = 2, 8, 8, 32
    key = jax.random.PRNGKey(0)
    k_x, k_adj, k_w = jax.random.split(key, 3)

    X = jax.random.normal(k_x, (b, T, N, d), jnp.float32)

    # symmetrically-normalised adjacency ('norm_adja' from the config)
    raw = (jax.random.uniform(k_adj, (N, N)) > 0.5).astype(jnp.float32)
    adj = jnp.maximum(raw, raw.T) + jnp.eye(N, dtype=jnp.float32)
    dinv = 1.0 / jnp.sqrt(jnp.sum(adj, axis=-1))
    A = dinv[:, None] * adj * dinv[None, :]

    # GCN linear weight (bias=False) and LayerNorm affine params
    limit = math.sqrt(6.0 / (d + d))
    Wg = jax.random.uniform(k_w, (d, d), jnp.float32, -limit, limit)
    gamma = jnp.ones((1, d), jnp.float32)
    beta = jnp.zeros((1, d), jnp.float32)

    out = jax.block_until_ready(jax.jit(sdgcn_forward)(X, A, Wg, gamma, beta))
    ref = sdgcn_reference(X, A, Wg, gamma, beta)

    assert out.shape == (b, T, N, d)
    assert bool(jnp.all(jnp.isfinite(out)))
    max_diff = float(jnp.max(jnp.abs(out - ref)))
    # bf16 MXU operands (f32 accumulation) -> loose tolerance vs f32 reference
    assert max_diff < 0.5, f"kernel/reference mismatch: max|diff|={max_diff}"
    print("KERNEL_OK")
</pallas_src>

<mosaic_0001>
module attributes {stable_mosaic.version = 11 : i64} {
  func.func @_sdgcn_kernel(%arg0: i32, %arg1: memref<8x8x32xf32, #tpu.memory_space<vmem>>, %arg2: memref<8x8xf32, #tpu.memory_space<vmem>>, %arg3: memref<32x32xf32, #tpu.memory_space<vmem>>, %arg4: memref<1x32xf32, #tpu.memory_space<vmem>>, %arg5: memref<1x32xf32, #tpu.memory_space<vmem>>, %arg6: memref<8x8x32xf32, #tpu.memory_space<vmem>>) attributes {dimension_semantics = [#tpu.dimension_semantics<parallel>], iteration_bounds = array<i64: 2>, scalar_prefetch = 0 : i64, scratch_operands = 0 : i64, tpu.core_type = #tpu.core_type<tc>, window_params = [{transform_indices = @transform_0, window_bounds = array<i64: 8, 8, 32>}, {pipeline_mode = #tpu.pipeline_mode<synchronous>, transform_indices = @transform_1, window_bounds = array<i64: 8, 8>}, {pipeline_mode = #tpu.pipeline_mode<synchronous>, transform_indices = @transform_2, window_bounds = array<i64: 32, 32>}, {pipeline_mode = #tpu.pipeline_mode<synchronous>, transform_indices = @transform_3, window_bounds = array<i64: 1, 32>}, {pipeline_mode = #tpu.pipeline_mode<synchronous>, transform_indices = @transform_4, window_bounds = array<i64: 1, 32>}, {transform_indices = @transform_5, window_bounds = array<i64: 8, 8, 32>}]} {
    %c0 = arith.constant 0 : index
    %c0_0 = arith.constant 0 : index
    %c0_1 = arith.constant 0 : index
    %0 = vector.load %arg1[%c0, %c0_0, %c0_1] : memref<8x8x32xf32, #tpu.memory_space<vmem>>, vector<8x8x32xf32>
    %1 = arith.truncf %0 : vector<8x8x32xf32> to vector<8x8x32xbf16>
    "tpu.trace_start"() <{level = 10 : i32, message = "gnd,gmd->gnm"}> : () -> ()
    %cst = arith.constant dense<0.000000e+00> : vector<8x8x8xf32>
    %2 = tpu.matmul %1, %1, %cst {dimension_numbers = #tpu.dot_dimension_numbers<[2], [2], [1], [1], [0, 0, 0, 1, 1, 1], [0], [0]>} : vector<8x8x32xbf16>, vector<8x8x32xbf16>, vector<8x8x8xf32> -> vector<8x8x8xf32>
    "tpu.trace_stop"() : () -> ()
    %cst_2 = arith.constant dense<0xFF800000> : vector<8x8xf32>
    %3 = vector.multi_reduction <maximumf>, %2, %cst_2 [2] : vector<8x8x8xf32> to vector<8x8xf32>
    %4 = vector.shape_cast %3 : vector<8x8xf32> to vector<8x8x1xf32>
    %5 = vector.broadcast %4 : vector<8x8x1xf32> to vector<8x8x8xf32>
    %6 = arith.subf %2, %5 : vector<8x8x8xf32>
    %7 = math.exp %6 : vector<8x8x8xf32>
    %cst_3 = arith.constant dense<0.000000e+00> : vector<8x8xf32>
    %8 = vector.multi_reduction <add>, %7, %cst_3 [2] : vector<8x8x8xf32> to vector<8x8xf32>
    %9 = vector.shape_cast %8 : vector<8x8xf32> to vector<8x8x1xf32>
    %10 = tpu.reciprocal %9 {approx = true} : vector<8x8x1xf32> -> vector<8x8x1xf32>
    %11 = vector.broadcast %10 : vector<8x8x1xf32> to vector<8x8x8xf32>
    %12 = arith.mulf %7, %11 : vector<8x8x8xf32>
    %cst_4 = arith.constant 0.176776692 : f32
    %13 = vector.broadcast %cst_4 : f32 to vector<8x8x8xf32>
    %14 = arith.mulf %12, %13 : vector<8x8x8xf32>
    %c0_5 = arith.constant 0 : index
    %c0_6 = arith.constant 0 : index
    %15 = vector.load %arg2[%c0_5, %c0_6] : memref<8x8xf32, #tpu.memory_space<vmem>>, vector<8x8xf32>
    %16 = vector.shape_cast %15 : vector<8x8xf32> to vector<1x8x8xf32>
    %17 = vector.broadcast %16 : vector<1x8x8xf32> to vector<8x8x8xf32>
    %18 = arith.mulf %17, %14 : vector<8x8x8xf32>
    %19 = arith.truncf %18 : vector<8x8x8xf32> to vector<8x8x8xbf16>
    "tpu.trace_start"() <{level = 10 : i32, message = "gnm,gmd->gnd"}> : () -> ()
    %cst_7 = arith.constant dense<0.000000e+00> : vector<8x8x32xf32>
    %20 = tpu.matmul %19, %1, %cst_7 {dimension_numbers = #tpu.dot_dimension_numbers<[2], [1], [1], [2], [0, 0, 0, 1, 1, 2], [0], [0]>} : vector<8x8x8xbf16>, vector<8x8x32xbf16>, vector<8x8x32xf32> -> vector<8x8x32xf32>
    "tpu.trace_stop"() : () -> ()
    %c0_8 = arith.constant 0 : index
    %c0_9 = arith.constant 0 : index
    %21 = vector.load %arg3[%c0_8, %c0_9] : memref<32x32xf32, #tpu.memory_space<vmem>>, vector<32x32xf32>
    %22 = arith.truncf %21 : vector<32x32xf32> to vector<32x32xbf16>
    %23 = vector.shape_cast %22 : vector<32x32xbf16> to vector<1x32x32xbf16>
    %24 = vector.shape_cast %23 : vector<1x32x32xbf16> to vector<1x32x32xbf16>
    %25 = vector.broadcast %24 : vector<1x32x32xbf16> to vector<8x32x32xbf16>
    %26 = arith.truncf %20 : vector<8x8x32xf32> to vector<8x8x32xbf16>
    "tpu.trace_start"() <{level = 10 : i32, message = "gnd,gde->gne"}> : () -> ()
    %cst_10 = arith.constant dense<0.000000e+00> : vector<8x8x32xf32>
    %27 = tpu.matmul %26, %25, %cst_10 {dimension_numbers = #tpu.dot_dimension_numbers<[2], [1], [1], [2], [0, 0, 0, 1, 1, 2], [0], [0]>} : vector<8x8x32xbf16>, vector<8x32x32xbf16>, vector<8x8x32xf32> -> vector<8x8x32xf32>
    "tpu.trace_stop"() : () -> ()
    %cst_11 = arith.constant 0.000000e+00 : f32
    %28 = vector.broadcast %cst_11 : f32 to vector<8x8x32xf32>
    %29 = arith.maximumf %27, %28 : vector<8x8x32xf32>
    %cst_12 = arith.constant 0.176776692 : f32
    %30 = vector.broadcast %cst_12 : f32 to vector<8x8x32xf32>
    %31 = arith.mulf %29, %30 : vector<8x8x32xf32>
    %cst_13 = arith.constant dense<0.000000e+00> : vector<8x8xf32>
    %32 = vector.multi_reduction <add>, %31, %cst_13 [2] : vector<8x8x32xf32> to vector<8x8xf32>
    %33 = vector.shape_cast %32 : vector<8x8xf32> to vector<8x8x1xf32>
    %cst_14 = arith.constant 3.200000e+01 : f32
    %34 = vector.broadcast %cst_14 : f32 to vector<8x8x1xf32>
    %35 = arith.divf %33, %34 : vector<8x8x1xf32>
    %36 = vector.broadcast %35 : vector<8x8x1xf32> to vector<8x8x32xf32>
    %37 = arith.subf %31, %36 : vector<8x8x32xf32>
    %38 = arith.mulf %37, %37 : vector<8x8x32xf32>
    %cst_15 = arith.constant dense<0.000000e+00> : vector<8x8xf32>
    %39 = vector.multi_reduction <add>, %38, %cst_15 [2] : vector<8x8x32xf32> to vector<8x8xf32>
    %40 = vector.shape_cast %39 : vector<8x8xf32> to vector<8x8x1xf32>
    %cst_16 = arith.constant 3.200000e+01 : f32
    %41 = vector.broadcast %cst_16 : f32 to vector<8x8x1xf32>
    %42 = arith.divf %40, %41 : vector<8x8x1xf32>
    %43 = vector.broadcast %35 : vector<8x8x1xf32> to vector<8x8x32xf32>
    %44 = arith.subf %31, %43 : vector<8x8x32xf32>
    %cst_17 = arith.constant 9.99999974E-6 : f32
    %45 = vector.broadcast %cst_17 : f32 to vector<8x8x1xf32>
    %46 = arith.addf %42, %45 : vector<8x8x1xf32>
    %47 = math.rsqrt %46 : vector<8x8x1xf32>
    %48 = vector.broadcast %47 : vector<8x8x1xf32> to vector<8x8x32xf32>
    %49 = arith.mulf %44, %48 : vector<8x8x32xf32>
    %c0_18 = arith.constant 0 : index
    %c0_19 = arith.constant 0 : index
    %50 = vector.load %arg4[%c0_18, %c0_19] : memref<1x32xf32, #tpu.memory_space<vmem>>, vector<1x32xf32>
    %51 = vector.shape_cast %50 : vector<1x32xf32> to vector<1x1x32xf32>
    %52 = vector.broadcast %51 : vector<1x1x32xf32> to vector<8x8x32xf32>
    %53 = arith.mulf %49, %52 : vector<8x8x32xf32>
    %c0_20 = arith.constant 0 : index
    %c0_21 = arith.constant 0 : index
    %54 = vector.load %arg5[%c0_20, %c0_21] : memref<1x32xf32, #tpu.memory_space<vmem>>, vector<1x32xf32>
    %55 = vector.shape_cast %54 : vector<1x32xf32> to vector<1x1x32xf32>
    %56 = vector.broadcast %55 : vector<1x1x32xf32> to vector<8x8x32xf32>
    %57 = arith.addf %53, %56 : vector<8x8x32xf32>
    %58 = arith.addf %57, %0 : vector<8x8x32xf32>
    %c0_22 = arith.constant 0 : index
    %c0_23 = arith.constant 0 : index
    %c0_24 = arith.constant 0 : index
    %59 = vector.load %arg6[%c0_22, %c0_23, %c0_24] : memref<8x8x32xf32, #tpu.memory_space<vmem>>, vector<8x8x32xf32>
    tpu.vector_store %arg6[%c0_22, %c0_23, %c0_24], %58 {strides = array<i32>} : memref<8x8x32xf32, #tpu.memory_space<vmem>>, vector<8x8x32xf32>,
    return
  }
  func.func @transform_0(%arg0: i32) -> (i32, i32, i32) {
    %c0_i32 = arith.constant 0 : i32
    %c0_i32_0 = arith.constant 0 : i32
    %c0_i32_1 = arith.constant 0 : i32
    return %arg0, %c0_i32, %c0_i32_0 : i32, i32, i32
  }
  func.func @transform_1(%arg0: i32) -> (i32, i32) {
    %c0_i32 = arith.constant 0 : i32
    %c0_i32_0 = arith.constant 0 : i32
    %c0_i32_1 = arith.constant 0 : i32
    return %c0_i32, %c0_i32_0 : i32, i32
  }
  func.func @transform_2(%arg0: i32) -> (i32, i32) {
    %c0_i32 = arith.constant 0 : i32
    %c0_i32_0 = arith.constant 0 : i32
    %c0_i32_1 = arith.constant 0 : i32
    return %c0_i32, %c0_i32_0 : i32, i32
  }
  func.func @transform_3(%arg0: i32) -> (i32, i32) {
    %c0_i32 = arith.constant 0 : i32
    %c0_i32_0 = arith.constant 0 : i32
    %c0_i32_1 = arith.constant 0 : i32
    return %c0_i32, %c0_i32_0 : i32, i32
  }
  func.func @transform_4(%arg0: i32) -> (i32, i32) {
    %c0_i32 = arith.constant 0 : i32
    %c0_i32_0 = arith.constant 0 : i32
    %c0_i32_1 = arith.constant 0 : i32
    return %c0_i32, %c0_i32_0 : i32, i32
  }
  func.func @transform_5(%arg0: i32) -> (i32, i32, i32) {
    %c0_i32 = arith.constant 0 : i32
    %c0_i32_0 = arith.constant 0 : i32
    %c0_i32_1 = arith.constant 0 : i32
    return %arg0, %c0_i32, %c0_i32_0 : i32, i32, i32
  }
}

</mosaic_0001>

<llo_original>
// kernel: sdgcn_forward.1
$region0: #{sdgcn_forward.1}
  #allocation0 [shape = 'u32[]', space=smem, size = 0x4, offset = 0x4, fixed_abs, tag = 'smem constant byte address 0x4 - core index']
  #allocation1 [shape = 'u32[72,128]{1,0:T(1,128)}', space=vmem, size = 0x9000, scoped, tag = 'internal scratch']
  %s0 = inlined_call_operand.hbm [shape: f32[16,8,32], index: 0, kind: input, shape index: {}]
  %s1 = inlined_call_operand.hbm [shape: f32[8,8], index: 1, kind: input, shape index: {}]
  %s2 = inlined_call_operand.hbm [shape: f32[32,32], index: 2, kind: input, shape index: {}]
  %s3 = inlined_call_operand.vmem [shape: f32[1,32], index: 3, kind: input, shape index: {}]
  %s4 = inlined_call_operand.vmem [shape: f32[1,32], index: 4, kind: input, shape index: {}]
  %s5 = inlined_call_operand.hbm [shape: f32[16,8,32], index: 5, kind: output, shape index: {}]
  %s6 = sld [smem:[#allocation0]]
  $region65: #{sdgcn_forward.1} parent=0
    _
  %s8 = ssub.s32 1, %s6
  %s9 = scalar_select 0, %s8, %s6
  $region1: #{sdgcn_forward.1} parent=0
    #allocation2 [shape = 'u8[65536]{0}', space=vmem, size = 0x10000, scoped, tag = 'input window, operand 0']
    #allocation3 [shape = 's32[2]{0}', space=sflag, size = 0x8, scoped, tag = 'scoped memory for sdgcn_forward.1']
    #allocation4 [shape = 's32[2]{0}', space=sflag, size = 0x8, scoped, tag = 'scoped memory for sdgcn_forward.1']
    #allocation5 [shape = 'u8[4096]{0}', space=vmem, size = 0x1000, scoped, tag = 'input window, operand 1, single buffered']
    #allocation6 [shape = 's32[1]{0}', space=sflag, size = 0x4, scoped, tag = 'scoped memory for sdgcn_forward.1']
    #allocation7 [shape = 'u8[16384]{0}', space=vmem, size = 0x4000, scoped, tag = 'input window, operand 2, single buffered']
    #allocation8 [shape = 'u8[65536]{0}', space=vmem, size = 0x10000, scoped, tag = 'output window, operand 0']
    %10 = vsyncpa [#allocation3], 0
    %s11 = scalar_lea.sflag [#allocation3], 1
    %12 = vsyncpa %s11, 0
    %13 = vsyncpa [#allocation6], 0
    %14 = vsyncpa [#allocation4], 0
    %s15 = scalar_lea.sflag [#allocation4], 1
    %16 = vsyncpa %s15, 0
    loop: start=0, step=1, limit=4
    $region2: #{sdgcn_forward.1} parent=1 // loop_pre_header
      _
    $region3: #{sdgcn_forward.1} parent=1 // loop_header
      %s18 = sphi 0, %s22
      %p19 = scmp.ge.s32.totalorder %s18, 4
      %s28 = sphi 0, %s30
      %s31 = sphi 0, %s28
      %s32 = sphi 0, %s31
      %s48 = sphi 0, %s32
      %s52 = sphi 0, %s52
      %s54 = sphi 0, %s52
      %s55 = sphi 0, %s54
      %s69 = sphi 0, %s55
      %s73 = sphi 0, %s73
      %s75 = sphi 0, %s73
      %s76 = sphi 0, %s75
      %s90 = sphi 0, %s76
      %s94 = sphi 0, %s94
      %s96 = sphi 0, %s94
      %s97 = sphi 0, %s96
      %s111 = sphi 0, %s97
      %s115 = sphi 0, %s115
      %s117 = sphi 0, %s115
      %s118 = sphi 0, %s117
      %s132 = sphi 0, %s118
      %s138 = sphi 0, %s140
      %s141 = sphi 0, %s138
      %s142 = sphi 0, %s141
      %s158 = sphi 0, %s142
    $region4: #{sdgcn_forward.1} parent=1 // loop_header_branch
      %21 = sbr.rel (%p19) target = $region8
    $region5: #{sdgcn_forward.1} parent=1 // loop_body
      %s23 = ssub.s32 %s18, 1
      %s24 = ssub.s32 %s18, 2
      %s25 = sadd.s32 %s18, 1
      %s26 = ssub.s32 %s18, %s25
      %p27 = scmp.eq.s32.totalorder %s26, 0
      %s29 = sadd.s32 %s28, 1
      %s30 = scalar_select %p27, %s28, %s29
      %p33 = pneg %p27
      %p34 = scmp.eq.s32.totalorder %s18, 1
      %p35 = por %p33, %p34
      %p36 = scmp.ne.s32.totalorder %s28, %s31
      %p37 = scmp.eq.s32.totalorder %s18, 0
      %p38 = por %p36, %p37
      %p39 = scmp.ne.s32.totalorder %s28, %s31
      %p40 = scmp.eq.s32.totalorder %s23, 1
      %p41 = por %p39, %p40
      %p42 = scmp.ne.s32.totalorder %s31, %s32
      %p43 = scmp.eq.s32.totalorder %s23, 0
      %p44 = por %p42, %p43
      %p45 = scmp.ne.s32.totalorder %s31, %s32
      %p46 = scmp.eq.s32.totalorder %s24, 1
      %p47 = por %p45, %p46
      %p49 = scmp.ne.s32.totalorder %s32, %s48
      %p50 = scmp.eq.s32.totalorder %s24, 0
      %p51 = por %p49, %p50
      %s53 = sadd.s32 %s52, 1
      %p56 = scmp.eq.s32.totalorder %s18, 1
      %p57 = scmp.ne.s32.totalorder %s52, %s54
      %p58 = scmp.eq.s32.totalorder %s18, 0
      %p59 = por %p57, %p58
      %p60 = scmp.ne.s32.totalorder %s52, %s54
      %p61 = scmp.eq.s32.totalorder %s23, 1
      %p62 = por %p60, %p61
      %p63 = scmp.ne.s32.totalorder %s54, %s55
      %p64 = scmp.eq.s32.totalorder %s23, 0
      %p65 = por %p63, %p64
      %p66 = scmp.ne.s32.totalorder %s54, %s55
      %p67 = scmp.eq.s32.totalorder %s24, 1
      %p68 = por %p66, %p67
      %p70 = scmp.ne.s32.totalorder %s55, %s69
      %p71 = scmp.eq.s32.totalorder %s24, 0
      %p72 = por %p70, %p71
      %s74 = sadd.s32 %s73, 1
      %p77 = scmp.eq.s32.totalorder %s18, 1
      %p78 = scmp.ne.s32.totalorder %s73, %s75
      %p79 = scmp.eq.s32.totalorder %s18, 0
      %p80 = por %p78, %p79
      %p81 = scmp.ne.s32.totalorder %s73, %s75
      %p82 = scmp.eq.s32.totalorder %s23, 1
      %p83 = por %p81, %p82
      %p84 = scmp.ne.s32.totalorder %s75, %s76
      %p85 = scmp.eq.s32.totalorder %s23, 0
      %p86 = por %p84, %p85
      %p87 = scmp.ne.s32.totalorder %s75, %s76
      %p88 = scmp.eq.s32.totalorder %s24, 1
      %p89 = por %p87, %p88
      %p91 = scmp.ne.s32.totalorder %s76, %s90
      %p92 = scmp.eq.s32.totalorder %s24, 0
      %p93 = por %p91, %p92
      %s95 = sadd.s32 %s94, 1
      %p98 = scmp.eq.s32.totalorder %s18, 1
      %p99 = scmp.ne.s32.totalorder %s94, %s96
      %p100 = scmp.eq.s32.totalorder %s18, 0
      %p101 = por %p99, %p100
      %p102 = scmp.ne.s32.totalorder %s94, %s96
      %p103 = scmp.eq.s32.totalorder %s23, 1
      %p104 = por %p102, %p103
      %p105 = scmp.ne.s32.totalorder %s96, %s97
      %p106 = scmp.eq.s32.totalorder %s23, 0
      %p107 = por %p105, %p106
      %p108 = scmp.ne.s32.totalorder %s96, %s97
      %p109 = scmp.eq.s32.totalorder %s24, 1
      %p110 = por %p108, %p109
      %p112 = scmp.ne.s32.totalorder %s97, %s111
      %p113 = scmp.eq.s32.totalorder %s24, 0
      %p114 = por %p112, %p113
      %s116 = sadd.s32 %s115, 1
      %p119 = scmp.eq.s32.totalorder %s18, 1
      %p120 = scmp.ne.s32.totalorder %s115, %s117
      %p121 = scmp.eq.s32.totalorder %s18, 0
      %p122 = por %p120, %p121
      %p123 = scmp.ne.s32.totalorder %s115, %s117
      %p124 = scmp.eq.s32.totalorder %s23, 1
      %p125 = por %p123, %p124
      %p126 = scmp.ne.s32.totalorder %s117, %s118
      %p127 = scmp.eq.s32.totalorder %s23, 0
      %p128 = por %p126, %p127
      %p129 = scmp.ne.s32.totalorder %s117, %s118
      %p130 = scmp.eq.s32.totalorder %s24, 1
      %p131 = por %p129, %p130
      %p133 = scmp.ne.s32.totalorder %s118, %s132
      %p134 = scmp.eq.s32.totalorder %s24, 0
      %p135 = por %p133, %p134
      %s136 = ssub.s32 %s18, %s25
      %p137 = scmp.eq.s32.totalorder %s136, 0
      %s139 = sadd.s32 %s138, 1
      %s140 = scalar_select %p137, %s138, %s139
      %p143 = pneg %p137
      %p144 = scmp.eq.s32.totalorder %s18, 1
      %p145 = por %p143, %p144
      %p146 = scmp.ne.s32.totalorder %s138, %s141
      %p147 = scmp.eq.s32.totalorder %s18, 0
      %p148 = por %p146, %p147
      %p149 = scmp.ne.s32.totalorder %s138, %s141
      %p150 = scmp.eq.s32.totalorder %s23, 1
      %p151 = por %p149, %p150
      %p152 = scmp.ne.s32.totalorder %s141, %s142
      %p153 = scmp.eq.s32.totalorder %s23, 0
      %p154 = por %p152, %p153
      %p155 = scmp.ne.s32.totalorder %s141, %s142
      %p156 = scmp.eq.s32.totalorder %s24, 1
      %p157 = por %p155, %p156
      %p159 = scmp.ne.s32.totalorder %s142, %s158
      %p160 = scmp.eq.s32.totalorder %s24, 0
      %p161 = por %p159, %p160
      %p162 = scmp.le.s32.totalorder 1, %s18
      %p163 = scmp.lt.s32.totalorder %s18, 3
      %p164 = pnand %p162, %p163
      %p165 = pneg %p164
      // Predicated region
      $region9: #{sdgcn_forward.1} parent=5 // pred_check
        _
      $region10: #{sdgcn_forward.1} parent=5 // pred_check_branch
        %167 = sbr.rel (%p164) target = $region12
      $region11: #{sdgcn_forward.1} parent=5 // pred_region
        %s168 = ssub.s32 %s18, 1
        // Predicated region
        $region13: #{sdgcn_forward.1} parent=11 // pred_check
          %p169 = pneg %p65
        $region14: #{sdgcn_forward.1} parent=11 // pred_check_branch
          %171 = sbr.rel (%p169) target = $region16
        $region15: #{sdgcn_forward.1} parent=11 // pred_region
          %173 = vsyncadd [#allocation6], 0
          %s175 = sshll.u32 %s1, 4
          %s176 = int_to_ptr.hbm [resolvable:$true] %s175
          %s177 = sshll.u32 [#allocation5], 4
          %s178 = int_to_ptr.vmem [resolvable:$true] %s177
          %180 = dma.hbm_to_vmem [thread:$0]  %s176, 128, %s178, [#allocation6]
        $region16: #{sdgcn_forward.1} parent=11 // pred_fallthru
          _
        // Predicated region
        $region17: #{sdgcn_forward.1} parent=11 // pred_check
          %p181 = pneg %p86
        $region18: #{sdgcn_forward.1} parent=11 // pred_check_branch
          %183 = sbr.rel (%p181) target = $region20
        $region19: #{sdgcn_forward.1} parent=11 // pred_region
          %185 = vsyncadd [#allocation6], 0
          %s186 = sshll.u32 %s2, 4
          %s187 = int_to_ptr.hbm [resolvable:$true] %s186
          %s188 = sshll.u32 [#allocation7], 4
          %s189 = int_to_ptr.vmem [resolvable:$true] %s188
          %194 = dma.hbm_to_vmem [thread:$0]  %s187, 512, %s189, [#allocation6], 128, 128, 8
        $region20: #{sdgcn_forward.1} parent=11 // pred_fallthru
          _
        // Predicated region
        $region21: #{sdgcn_forward.1} parent=11 // pred_check
          %p195 = pneg %p107
        $region22: #{sdgcn_forward.1} parent=11 // pred_check_branch
          %197 = sbr.rel (%p195) target = $region24
        $region23: #{sdgcn_forward.1} parent=11 // pred_region
          _
        $region24: #{sdgcn_forward.1} parent=11 // pred_fallthru
          _
        // Predicated region
        $region25: #{sdgcn_forward.1} parent=11 // pred_check
          %p198 = pneg %p128
        $region26: #{sdgcn_forward.1} parent=11 // pred_check_branch
          %200 = sbr.rel (%p198) target = $region28
        $region27: #{sdgcn_forward.1} parent=11 // pred_region
          _
        $region28: #{sdgcn_forward.1} parent=11 // pred_fallthru
          _
      $region12: #{sdgcn_forward.1} parent=5 // pred_fallthru
        _
      %p201 = scmp.lt.s32.totalorder %s18, 2
      // Predicated region
      $region29: #{sdgcn_forward.1} parent=5 // pred_check
        %p202 = pneg %p201
      $region30: #{sdgcn_forward.1} parent=5 // pred_check_branch
        %204 = sbr.rel (%p202) target = $region32
      $region31: #{sdgcn_forward.1} parent=5 // pred_region
        // Predicated region
        $region33: #{sdgcn_forward.1} parent=31 // pred_check
          %p205 = pneg %p38
        $region34: #{sdgcn_forward.1} parent=31 // pred_check_branch
          %207 = sbr.rel (%p205) target = $region36
        $region35: #{sdgcn_forward.1} parent=31 // pred_region
          %s208 = sand.u32 %s28, 1
          %s209 = scalar_lea.sflag [#allocation3], %s208
          %s210 = sand.u32 %s28, 1
          %s211 = smul.addr %s210, 64
          %s212 = scalar_lea.vmem [#allocation2], %s211
          %s213 = smul.u32 8, %s18
          %215 = vsyncadd %s209, 0
          %s216 = smul.addr %s213, 8
          %s217 = scalar_lea.hbm %s0, %s216
          %s218 = sshll.u32 %s217, 4
          %s219 = int_to_ptr.hbm [resolvable:$true] %s218
          %s220 = sshll.u32 %s212, 4
          %s221 = int_to_ptr.vmem [resolvable:$true] %s220
          %226 = dma.hbm_to_vmem [thread:$0]  %s219, 1024, %s221, %s209, 128, 128, 8
        $region36: #{sdgcn_forward.1} parent=31 // pred_fallthru
          _
      $region32: #{sdgcn_forward.1} parent=5 // pred_fallthru
        _
      %p227 = scmp.le.s32.totalorder 1, %s18
      %p228 = scmp.lt.s32.totalorder %s18, 3
      %p229 = pnand %p227, %p228
      %p230 = pneg %p229
      // Predicated region
      $region37: #{sdgcn_forward.1} parent=5 // pred_check
        _
      $region38: #{sdgcn_forward.1} parent=5 // pred_check_branch
        %232 = sbr.rel (%p229) target = $region40
      $region39: #{sdgcn_forward.1} parent=5 // pred_region
        %s233 = ssub.s32 %s18, 1
        %s234 = sand.u32 %s31, 1
        %s235 = scalar_lea.sflag [#allocation3], %s234
        %s236 = sand.u32 %s31, 1
        %s237 = smul.addr %s236, 64
        %s238 = scalar_lea.vmem [#allocation2], %s237
        // Predicated region
        $region41: #{sdgcn_forward.1} parent=39 // pred_check
          %p239 = pneg %p44
        $region42: #{sdgcn_forward.1} parent=39 // pred_check_branch
          %241 = sbr.rel (%p239) target = $region44
        $region43: #{sdgcn_forward.1} parent=39 // pred_region
          %243 = dma.done %s235, 1024
        $region44: #{sdgcn_forward.1} parent=39 // pred_fallthru
          _
        // Predicated region
        $region45: #{sdgcn_forward.1} parent=39 // pred_check
          %p244 = pneg %p65
        $region46: #{sdgcn_forward.1} parent=39 // pred_check_branch
          %246 = sbr.rel (%p244) target = $region48
        $region47: #{sdgcn_forward.1} parent=39 // pred_region
          %248 = dma.done [#allocation6], 128
        $region48: #{sdgcn_forward.1} parent=39 // pred_fallthru
          _
        // Predicated region
        $region49: #{sdgcn_forward.1} parent=39 // pred_check
          %p249 = pneg %p86
        $region50: #{sdgcn_forward.1} parent=39 // pred_check_branch
          %251 = sbr.rel (%p249) target = $region52
        $region51: #{sdgcn_forward.1} parent=39 // pred_region
          %253 = dma.done [#allocation6], 512
        $region52: #{sdgcn_forward.1} parent=39 // pred_fallthru
          _
        %s254 = sand.u32 %s31, 1
        %s255 = scalar_lea.sflag [#allocation3], %s254
        %s256 = sand.u32 %s31, 1
        %s257 = smul.addr %s256, 64
        %s258 = scalar_lea.vmem [#allocation2], %s257
        %p259 = pneg %p44
        %p260 = pneg %p41
        %p261 = pneg %p65
        %p262 = pneg %p62
        %p263 = pneg %p86
        %p264 = pneg %p83
        %p265 = pneg %p107
        %p266 = pneg %p104
        %p267 = pneg %p128
        %p268 = pneg %p125
        %p269 = pneg %p154
        %p270 = pneg %p151
        %s271 = sand.u32 %s141, 1
        %s272 = scalar_lea.sflag [#allocation4], %s271
        %s273 = sand.u32 %s141, 1
        %s274 = smul.addr %s273, 64
        %s275 = scalar_lea.vmem [#allocation8], %s274
        %s276 = smul.u32 8, %s23
        %s277 = smul.u32 8, %s23
        %v279 = vld [vmem:[%s238] sm:$0xff]
        %v280 = vld [vmem:[%s238 + $0x8] sm:$0xff]
        %v281 = vld [vmem:[%s238 + $0x10] sm:$0xff]
        %v282 = vld [vmem:[%s238 + $0x18] sm:$0xff]
        %v283 = vld [vmem:[%s238 + $0x20] sm:$0xff]
        %v284 = vld [vmem:[%s238 + $0x28] sm:$0xff]
        %v285 = vld [vmem:[%s238 + $0x30] sm:$0xff]
        %v286 = vld [vmem:[%s238 + $0x38] sm:$0xff]
        %v287 = vpack.c.bf16 %v279, %v279
        %v288 = vpack.c.bf16 %v280, %v280
        %v289 = vpack.c.bf16 %v281, %v281
        %v290 = vpack.c.bf16 %v282, %v282
        %v291 = vpack.c.bf16 %v283, %v283
        %v292 = vpack.c.bf16 %v284, %v284
        %v293 = vpack.c.bf16 %v285, %v285
        %v294 = vpack.c.bf16 %v286, %v286
        %vm295 = vcmask 261120
        %v297 = vsel %vm295, %v287, 0
        %299 = vmatpush.bf16.xpose.msra.mxu0 0
        %300 = vmatpush.bf16.xpose.msra.mxu0 0
        %301 = vmatpush.bf16.xpose.msra.mxu0 0
        %302 = vmatpush.bf16.xpose.msra.mxu0 0
        %303 = vmatpush.bf16.xpose.msra.mxu0 0
        %304 = vmatpush.bf16.xpose.msra.mxu0 0
        %305 = vmatpush.bf16.xpose.msra.mxu0 0
        %306 = vmatpush.bf16.xpose.msra.mxu0 %v297
        %307 = vmatmul.bf16.gmra.mxu0 %v297
        %v308 = vpop.f32.mrf.mxu0
        %v309 = vadd.f32 0.0, %v308
        %v310 = vpop.f32.mrf.mxu0
        %311 = vdwg.mxu0
        %v313 = vsel %vm295, %v288, 0
        %315 = vmatpush.bf16.xpose.msra.mxu0 0
        %316 = vmatpush.bf16.xpose.msra.mxu0 0
        %317 = vmatpush.bf16.xpose.msra.mxu0 0
        %318 = vmatpush.bf16.xpose.msra.mxu0 0
        %319 = vmatpush.bf16.xpose.msra.mxu0 0
        %320 = vmatpush.bf16.xpose.msra.mxu0 0
        %321 = vmatpush.bf16.xpose.msra.mxu0 0
        %322 = vmatpush.bf16.xpose.msra.mxu0 %v313
        %323 = vmatmul.bf16.gmra.mxu0 %v313
        %v324 = vpop.f32.mrf.mxu0
        %v325 = vadd.f32 0.0, %v324
        %v326 = vpop.f32.mrf.mxu0
        %327 = vdwg.mxu0
        %v329 = vsel %vm295, %v289, 0
        %331 = vmatpush.bf16.xpose.msra.mxu0 0
        %332 = vmatpush.bf16.xpose.msra.mxu0 0
        %333 = vmatpush.bf16.xpose.msra.mxu0 0
        %334 = vmatpush.bf16.xpose.msra.mxu0 0
        %335 = vmatpush.bf16.xpose.msra.mxu0 0
        %336 = vmatpush.bf16.xpose.msra.mxu0 0
        %337 = vmatpush.bf16.xpose.msra.mxu0 0
        %338 = vmatpush.bf16.xpose.msra.mxu0 %v329
        %339 = vmatmul.bf16.gmra.mxu0 %v329
        %v340 = vpop.f32.mrf.mxu0
        %v341 = vadd.f32 0.0, %v340
        %v342 = vpop.f32.mrf.mxu0
        %343 = vdwg.mxu0
        %v345 = vsel %vm295, %v290, 0
        %347 = vmatpush.bf16.xpose.msra.mxu0 0
        %348 = vmatpush.bf16.xpose.msra.mxu0 0
        %349 = vmatpush.bf16.xpose.msra.mxu0 0
        %350 = vmatpush.bf16.xpose.msra.mxu0 0
        %351 = vmatpush.bf16.xpose.msra.mxu0 0
        %352 = vmatpush.bf16.xpose.msra.mxu0 0
        %353 = vmatpush.bf16.xpose.msra.mxu0 0
        %354 = vmatpush.bf16.xpose.msra.mxu0 %v345
        %355 = vmatmul.bf16.gmra.mxu0 %v345
        %v356 = vpop.f32.mrf.mxu0
        %v357 = vadd.f32 0.0, %v356
        %v358 = vpop.f32.mrf.mxu0
        %359 = vdwg.mxu0
        %v361 = vsel %vm295, %v291, 0
        %363 = vmatpush.bf16.xpose.msra.mxu0 0
        %364 = vmatpush.bf16.xpose.msra.mxu0 0
        %365 = vmatpush.bf16.xpose.msra.mxu0 0
        %366 = vmatpush.bf16.xpose.msra.mxu0 0
        %367 = vmatpush.bf16.xpose.msra.mxu0 0
        %368 = vmatpush.bf16.xpose.msra.mxu0 0
        %369 = vmatpush.bf16.xpose.msra.mxu0 0
        %370 = vmatpush.bf16.xpose.msra.mxu0 %v361
        %371 = vmatmul.bf16.gmra.mxu0 %v361
        %v372 = vpop.f32.mrf.mxu0
        %v373 = vadd.f32 0.0, %v372
        %v374 = vpop.f32.mrf.mxu0
        %375 = vdwg.mxu0
        %v377 = vsel %vm295, %v292, 0
        %379 = vmatpush.bf16.xpose.msra.mxu0 0
        %380 = vmatpush.bf16.xpose.msra.mxu0 0
        %381 = vmatpush.bf16.xpose.msra.mxu0 0
        %382 = vmatpush.bf16.xpose.msra.mxu0 0
        %383 = vmatpush.bf16.xpose.msra.mxu0 0
        %384 = vmatpush.bf16.xpose.msra.mxu0 0
        %385 = vmatpush.bf16.xpose.msra.mxu0 0
        %386 = vmatpush.bf16.xpose.msra.mxu0 %v377
        %387 = vmatmul.bf16.gmra.mxu0 %v377
        %v388 = vpop.f32.mrf.mxu0
        %v389 = vadd.f32 0.0, %v388
        %v390 = vpop.f32.mrf.mxu0
        %391 = vdwg.mxu0
        %v393 = vsel %vm295, %v293, 0
        %395 = vmatpush.bf16.xpose.msra.mxu0 0
        %396 = vmatpush.bf16.xpose.msra.mxu0 0
        %397 = vmatpush.bf16.xpose.msra.mxu0 0
        %398 = vmatpush.bf16.xpose.msra.mxu0 0
        %399 = vmatpush.bf16.xpose.msra.mxu0 0
        %400 = vmatpush.bf16.xpose.msra.mxu0 0
        %401 = vmatpush.bf16.xpose.msra.mxu0 0
        %402 = vmatpush.bf16.xpose.msra.mxu0 %v393
        %403 = vmatmul.bf16.gmra.mxu0 %v393
        %v404 = vpop.f32.mrf.mxu0
        %v405 = vadd.f32 0.0, %v404
        %v406 = vpop.f32.mrf.mxu0
        %407 = vdwg.mxu0
        %v409 = vsel %vm295, %v294, 0
        %411 = vmatpush.bf16.xpose.msra.mxu0 0
        %412 = vmatpush.bf16.xpose.msra.mxu0 0
        %413 = vmatpush.bf16.xpose.msra.mxu0 0
        %414 = vmatpush.bf16.xpose.msra.mxu0 0
        %415 = vmatpush.bf16.xpose.msra.mxu0 0
        %416 = vmatpush.bf16.xpose.msra.mxu0 0
        %417 = vmatpush.bf16.xpose.msra.mxu0 0
        %418 = vmatpush.bf16.xpose.msra.mxu0 %v409
        %419 = vmatmul.bf16.gmra.mxu0 %v409
        %v420 = vpop.f32.mrf.mxu0
        %v421 = vadd.f32 0.0, %v420
        %v422 = vpop.f32.mrf.mxu0
        %423 = vdwg.mxu0
        %vm424 = vcmask 64512
        %v425 = vsel %vm424, %v309, -inf
        %426 = vmax.xlane.f32.xlu0 %v425
        %v427 = vpop.xlane.xlu0 %426
        %v428 = vsel %vm424, %v325, -inf
        %429 = vmax.xlane.f32.xlu0 %v428
        %v430 = vpop.xlane.xlu0 %429
        %v431 = vsel %vm424, %v341, -inf
        %432 = vmax.xlane.f32.xlu0 %v431
        %v433 = vpop.xlane.xlu0 %432
        %v434 = vsel %vm424, %v357, -inf
        %435 = vmax.xlane.f32.xlu0 %v434
        %v436 = vpop.xlane.xlu0 %435
        %v437 = vsel %vm424, %v373, -inf
        %438 = vmax.xlane.f32.xlu0 %v437
        %v439 = vpop.xlane.xlu0 %438
        %v440 = vsel %vm424, %v389, -inf
        %441 = vmax.xlane.f32.xlu0 %v440
        %v442 = vpop.xlane.xlu0 %441
        %v443 = vsel %vm424, %v405, -inf
        %444 = vmax.xlane.f32.xlu0 %v443
        %v445 = vpop.xlane.xlu0 %444
        %v446 = vsel %vm424, %v421, -inf
        %447 = vmax.xlane.f32.xlu0 %v446
        %v448 = vpop.xlane.xlu0 %447
        %v449 = vsub.f32 %v309, %v427
        %v450 = vsub.f32 %v325, %v430
        %v451 = vsub.f32 %v341, %v433
        %v452 = vsub.f32 %v357, %v436
        %v453 = vsub.f32 %v373, %v439
        %v454 = vsub.f32 %v389, %v442
        %v455 = vsub.f32 %v405, %v445
        %v456 = vsub.f32 %v421, %v448
        %v457 = vmul.f32 %v449, 1.442695
        %v458 = vpow.pop %v457
        %v459 = vmul.f32 %v450, 1.442695
        %v460 = vpow.pop %v459
        %v461 = vmul.f32 %v451, 1.442695
        %v462 = vpow.pop %v461
        %v463 = vmul.f32 %v452, 1.442695
        %v464 = vpow.pop %v463
        %v465 = vmul.f32 %v453, 1.442695
        %v466 = vpow.pop %v465
        %v467 = vmul.f32 %v454, 1.442695
        %v468 = vpow.pop %v467
        %v469 = vmul.f32 %v455, 1.442695
        %v470 = vpow.pop %v469
        %v471 = vmul.f32 %v456, 1.442695
        %v472 = vpow.pop %v471
        %v473 = vsel %vm424, %v458, 0.0
        %474 = vadd.xlane.f32.xlu0 %v473
        %v475 = vpop.xlane.xlu0 %474
        %v476 = vsel %vm424, %v460, 0.0
        %477 = vadd.xlane.f32.xlu0 %v476
        %v478 = vpop.xlane.xlu0 %477
        %v479 = vsel %vm424, %v462, 0.0
        %480 = vadd.xlane.f32.xlu0 %v479
        %v481 = vpop.xlane.xlu0 %480
        %v482 = vsel %vm424, %v464, 0.0
        %483 = vadd.xlane.f32.xlu0 %v482
        %v484 = vpop.xlane.xlu0 %483
        %v485 = vsel %vm424, %v466, 0.0
        %486 = vadd.xlane.f32.xlu0 %v485
        %v487 = vpop.xlane.xlu0 %486
        %v488 = vsel %vm424, %v468, 0.0
        %489 = vadd.xlane.f32.xlu0 %v488
        %v490 = vpop.xlane.xlu0 %489
        %v491 = vsel %vm424, %v470, 0.0
        %492 = vadd.xlane.f32.xlu0 %v491
        %v493 = vpop.xlane.xlu0 %492
        %v494 = vsel %vm424, %v472, 0.0
        %495 = vadd.xlane.f32.xlu0 %v494
        %v496 = vpop.xlane.xlu0 %495
        %v497 = vrcp.pop %v475
        %v498 = vrcp.pop %v478
        %v499 = vrcp.pop %v481
        %v500 = vrcp.pop %v484
        %v501 = vrcp.pop %v487
        %v502 = vrcp.pop %v490
        %v503 = vrcp.pop %v493
        %v504 = vrcp.pop %v496
        %v505 = vmul.f32 %v458, %v497
        %v506 = vmul.f32 %v460, %v498
        %v507 = vmul.f32 %v462, %v499
        %v508 = vmul.f32 %v464, %v500
        %v509 = vmul.f32 %v466, %v501
        %v510 = vmul.f32 %v468, %v502
        %v511 = vmul.f32 %v470, %v503
        %v512 = vmul.f32 %v472, %v504
        %v513 = vmul.f32 %v505, 0.17677669
        %v514 = vmul.f32 %v506, 0.17677669
        %v515 = vmul.f32 %v507, 0.17677669
        %v516 = vmul.f32 %v508, 0.17677669
        %v517 = vmul.f32 %v509, 0.17677669
        %v518 = vmul.f32 %v510, 0.17677669
        %v519 = vmul.f32 %v511, 0.17677669
        %v520 = vmul.f32 %v512, 0.17677669
        %v521 = vld [vmem:[#allocation5] sm:$0xff]
        %v522 = vmul.f32 %v521, %v513
        %v523 = vmul.f32 %v521, %v514
        %v524 = vmul.f32 %v521, %v515
        %v525 = vmul.f32 %v521, %v516
        %v526 = vmul.f32 %v521, %v517
        %v527 = vmul.f32 %v521, %v518
        %v528 = vmul.f32 %v521, %v519
        %v529 = vmul.f32 %v521, %v520
        %v530 = vpack.c.bf16 %v522, %v522
        %v531 = vpack.c.bf16 %v523, %v523
        %v532 = vpack.c.bf16 %v524, %v524
        %v533 = vpack.c.bf16 %v525, %v525
        %v534 = vpack.c.bf16 %v526, %v526
        %v535 = vpack.c.bf16 %v527, %v527
        %v536 = vpack.c.bf16 %v528, %v528
        %v537 = vpack.c.bf16 %v529, %v529
        %v539 = vsel %vm424, %v530, 0
        %vm541 = vcmask 1043456
        %v542 = vsel %vm541, %v287, 0
        %544 = vmatpush.bf16.msra.mxu0 0
        %545 = vmatpush.bf16.msra.mxu0 0
        %546 = vmatpush.bf16.msra.mxu0 0
        %547 = vmatpush.bf16.msra.mxu0 0
        %548 = vmatpush.bf16.msra.mxu0 0
        %549 = vmatpush.bf16.msra.mxu0 0
        %550 = vmatpush.bf16.msra.mxu0 0
        %551 = vmatpush.bf16.msra.mxu0 %v542
        %552 = vmatmul.bf16.gmra.mxu0 %v539
        %v553 = vpop.f32.mrf.mxu0
        %v554 = vadd.f32 0.0, %v553
        %v555 = vpop.f32.mrf.mxu0
        %556 = vdwg.mxu0
        %v558 = vsel %vm424, %v531, 0
        %v560 = vsel %vm541, %v288, 0
        %562 = vmatpush.bf16.msra.mxu0 0
        %563 = vmatpush.bf16.msra.mxu0 0
        %564 = vmatpush.bf16.msra.mxu0 0
        %565 = vmatpush.bf16.msra.mxu0 0
        %566 = vmatpush.bf16.msra.mxu0 0
        %567 = vmatpush.bf16.msra.mxu0 0
        %568 = vmatpush.bf16.msra.mxu0 0
        %569 = vmatpush.bf16.msra.mxu0 %v560
        %570 = vmatmul.bf16.gmra.mxu0 %v558
        %v571 = vpop.f32.mrf.mxu0
        %v572 = vadd.f32 0.0, %v571
        %v573 = vpop.f32.mrf.mxu0
        %574 = vdwg.mxu0
        %v576 = vsel %vm424, %v532, 0
        %v578 = vsel %vm541, %v289, 0
        %580 = vmatpush.bf16.msra.mxu0 0
        %581 = vmatpush.bf16.msra.mxu0 0
        %582 = vmatpush.bf16.msra.mxu0 0
        %583 = vmatpush.bf16.msra.mxu0 0
        %584 = vmatpush.bf16.msra.mxu0 0
        %585 = vmatpush.bf16.msra.mxu0 0
        %586 = vmatpush.bf16.msra.mxu0 0
        %587 = vmatpush.bf16.msra.mxu0 %v578
        %588 = vmatmul.bf16.gmra.mxu0 %v576
        %v589 = vpop.f32.mrf.mxu0
        %v590 = vadd.f32 0.0, %v589
        %v591 = vpop.f32.mrf.mxu0
        %592 = vdwg.mxu0
        %v594 = vsel %vm424, %v533, 0
        %v596 = vsel %vm541, %v290, 0
        %598 = vmatpush.bf16.msra.mxu0 0
        %599 = vmatpush.bf16.msra.mxu0 0
        %600 = vmatpush.bf16.msra.mxu0 0
        %601 = vmatpush.bf16.msra.mxu0 0
        %602 = vmatpush.bf16.msra.mxu0 0
        %603 = vmatpush.bf16.msra.mxu0 0
        %604 = vmatpush.bf16.msra.mxu0 0
        %605 = vmatpush.bf16.msra.mxu0 %v596
        %606 = vmatmul.bf16.gmra.mxu0 %v594
        %v607 = vpop.f32.mrf.mxu0
        %v608 = vadd.f32 0.0, %v607
        %v609 = vpop.f32.mrf.mxu0
        %610 = vdwg.mxu0
        %v612 = vsel %vm424, %v534, 0
        %v614 = vsel %vm541, %v291, 0
        %616 = vmatpush.bf16.msra.mxu0 0
        %617 = vmatpush.bf16.msra.mxu0 0
        %618 = vmatpush.bf16.msra.mxu0 0
        %619 = vmatpush.bf16.msra.mxu0 0
        %620 = vmatpush.bf16.msra.mxu0 0
        %621 = vmatpush.bf16.msra.mxu0 0
        %622 = vmatpush.bf16.msra.mxu0 0
        %623 = vmatpush.bf16.msra.mxu0 %v614
        %624 = vmatmul.bf16.gmra.mxu0 %v612
        %v625 = vpop.f32.mrf.mxu0
        %v626 = vadd.f32 0.0, %v625
        %v627 = vpop.f32.mrf.mxu0
        %628 = vdwg.mxu0
        %v630 = vsel %vm424, %v535, 0
        %v632 = vsel %vm541, %v292, 0
        %634 = vmatpush.bf16.msra.mxu0 0
        %635 = vmatpush.bf16.msra.mxu0 0
        %636 = vmatpush.bf16.msra.mxu0 0
        %637 = vmatpush.bf16.msra.mxu0 0
        %638 = vmatpush.bf16.msra.mxu0 0
        %639 = vmatpush.bf16.msra.mxu0 0
        %640 = vmatpush.bf16.msra.mxu0 0
        %641 = vmatpush.bf16.msra.mxu0 %v632
        %642 = vmatmul.bf16.gmra.mxu0 %v630
        %v643 = vpop.f32.mrf.mxu0
        %v644 = vadd.f32 0.0, %v643
        %v645 = vpop.f32.mrf.mxu0
        %646 = vdwg.mxu0
        %v648 = vsel %vm424, %v536, 0
        %v650 = vsel %vm541, %v293, 0
        %652 = vmatpush.bf16.msra.mxu0 0
        %653 = vmatpush.bf16.msra.mxu0 0
        %654 = vmatpush.bf16.msra.mxu0 0
        %655 = vmatpush.bf16.msra.mxu0 0
        %656 = vmatpush.bf16.msra.mxu0 0
        %657 = vmatpush.bf16.msra.mxu0 0
        %658 = vmatpush.bf16.msra.mxu0 0
        %659 = vmatpush.bf16.msra.mxu0 %v650
        %660 = vmatmul.bf16.gmra.mxu0 %v648
        %v661 = vpop.f32.mrf.mxu0
        %v662 = vadd.f32 0.0, %v661
        %v663 = vpop.f32.mrf.mxu0
        %664 = vdwg.mxu0
        %v666 = vsel %vm424, %v537, 0
        %v668 = vsel %vm541, %v294, 0
        %670 = vmatpush.bf16.msra.mxu0 0
        %671 = vmatpush.bf16.msra.mxu0 0
        %672 = vmatpush.bf16.msra.mxu0 0
        %673 = vmatpush.bf16.msra.mxu0 0
        %674 = vmatpush.bf16.msra.mxu0 0
        %675 = vmatpush.bf16.msra.mxu0 0
        %676 = vmatpush.bf16.msra.mxu0 0
        %677 = vmatpush.bf16.msra.mxu0 %v668
        %678 = vmatmul.bf16.gmra.mxu0 %v666
        %v679 = vpop.f32.mrf.mxu0
        %v680 = vadd.f32 0.0, %v679
        %v681 = vpop.f32.mrf.mxu0
        %682 = vdwg.mxu0
        %v683 = vld [vmem:[#allocation7] sm:$0xff]
        %v684 = vld [vmem:[#allocation7 + $0x8] sm:$0xff]
        %v685 = vld [vmem:[#allocation7 + $0x10] sm:$0xff]
        %v686 = vld [vmem:[#allocation7 + $0x18] sm:$0xff]
        %v687 = vpack.c.bf16 %v683, %v683
        %v688 = vpack.c.bf16 %v684, %v684
        %v689 = vpack.c.bf16 %v685, %v685
        %v690 = vpack.c.bf16 %v686, %v686
        %v691 = vpack.c.bf16 %v554, %v554
        %v692 = vpack.c.bf16 %v572, %v572
        %v693 = vpack.c.bf16 %v590, %v590
        %v694 = vpack.c.bf16 %v608, %v608
        %v695 = vpack.c.bf16 %v626, %v626
        %v696 = vpack.c.bf16 %v644, %v644
        %v697 = vpack.c.bf16 %v662, %v662
        %v698 = vpack.c.bf16 %v680, %v680
        %v703 = vunpack.c.l.b16 %v687
        %v704 = vunpack.c.l.b16 %v688
        %v705 = vunpack.c.l.b16 %v689
        %v706 = vunpack.c.l.b16 %v690
        %v707 = vpack.c.b16 %v704, %v703
        %v708 = vpack.c.b16 %v706, %v705
        %v712 = vsel %vm295, %v691, 0
        %714 = vmatpush.bf16.msra.mxu0 0
        %715 = vmatpush.bf16.msra.mxu0 0
        %716 = vmatpush.bf16.msra.mxu0 0
        %717 = vmatpush.bf16.msra.mxu0 0
        %718 = vmatpush.bf16.msra.mxu0 0
        %719 = vmatpush.bf16.msra.mxu0 0
        %720 = vmatpush.bf16.msra.mxu0 %v708
        %721 = vmatpush.bf16.msra.mxu0 %v707
        %722 = vmatmul.bf16.gmra.mxu0 %v712
        %v723 = vpop.f32.mrf.mxu0
        %v724 = vadd.f32 0.0, %v723
        %v725 = vpop.f32.mrf.mxu0
        %726 = vdwg.mxu0
        %v728 = vsel %vm295, %v692, 0
        %730 = vmatpush.bf16.msra.mxu0 0
        %731 = vmatpush.bf16.msra.mxu0 0
        %732 = vmatpush.bf16.msra.mxu0 0
        %733 = vmatpush.bf16.msra.mxu0 0
        %734 = vmatpush.bf16.msra.mxu0 0
        %735 = vmatpush.bf16.msra.mxu0 0
        %736 = vmatpush.bf16.msra.mxu0 %v708
        %737 = vmatpush.bf16.msra.mxu0 %v707
        %738 = vmatmul.bf16.gmra.mxu0 %v728
        %v739 = vpop.f32.mrf.mxu0
        %v740 = vadd.f32 0.0, %v739
        %v741 = vpop.f32.mrf.mxu0
        %742 = vdwg.mxu0
        %v744 = vsel %vm295, %v693, 0
        %746 = vmatpush.bf16.msra.mxu0 0
        %747 = vmatpush.bf16.msra.mxu0 0
        %748 = vmatpush.bf16.msra.mxu0 0
        %749 = vmatpush.bf16.msra.mxu0 0
        %750 = vmatpush.bf16.msra.mxu0 0
        %751 = vmatpush.bf16.msra.mxu0 0
        %752 = vmatpush.bf16.msra.mxu0 %v708
        %753 = vmatpush.bf16.msra.mxu0 %v707
        %754 = vmatmul.bf16.gmra.mxu0 %v744
        %v755 = vpop.f32.mrf.mxu0
        %v756 = vadd.f32 0.0, %v755
        %v757 = vpop.f32.mrf.mxu0
        %758 = vdwg.mxu0
        %v760 = vsel %vm295, %v694, 0
        %762 = vmatpush.bf16.msra.mxu0 0
        %763 = vmatpush.bf16.msra.mxu0 0
        %764 = vmatpush.bf16.msra.mxu0 0
        %765 = vmatpush.bf16.msra.mxu0 0
        %766 = vmatpush.bf16.msra.mxu0 0
        %767 = vmatpush.bf16.msra.mxu0 0
        %768 = vmatpush.bf16.msra.mxu0 %v708
        %769 = vmatpush.bf16.msra.mxu0 %v707
        %770 = vmatmul.bf16.gmra.mxu0 %v760
        %v771 = vpop.f32.mrf.mxu0
        %v772 = vadd.f32 0.0, %v771
        %v773 = vpop.f32.mrf.mxu0
        %774 = vdwg.mxu0
        %v776 = vsel %vm295, %v695, 0
        %778 = vmatpush.bf16.msra.mxu0 0
        %779 = vmatpush.bf16.msra.mxu0 0
        %780 = vmatpush.bf16.msra.mxu0 0
        %781 = vmatpush.bf16.msra.mxu0 0
        %782 = vmatpush.bf16.msra.mxu0 0
        %783 = vmatpush.bf16.msra.mxu0 0
        %784 = vmatpush.bf16.msra.mxu0 %v708
        %785 = vmatpush.bf16.msra.mxu0 %v707
        %786 = vmatmul.bf16.gmra.mxu0 %v776
        %v787 = vpop.f32.mrf.mxu0
        %v788 = vadd.f32 0.0, %v787
        %v789 = vpop.f32.mrf.mxu0
        %790 = vdwg.mxu0
        %v792 = vsel %vm295, %v696, 0
        %794 = vmatpush.bf16.msra.mxu0 0
        %795 = vmatpush.bf16.msra.mxu0 0
        %796 = vmatpush.bf16.msra.mxu0 0
        %797 = vmatpush.bf16.msra.mxu0 0
        %798 = vmatpush.bf16.msra.mxu0 0
        %799 = vmatpush.bf16.msra.mxu0 0
        %800 = vmatpush.bf16.msra.mxu0 %v708
        %801 = vmatpush.bf16.msra.mxu0 %v707
        %802 = vmatmul.bf16.gmra.mxu0 %v792
        %v803 = vpop.f32.mrf.mxu0
        %v804 = vadd.f32 0.0, %v803
        %v805 = vpop.f32.mrf.mxu0
        %806 = vdwg.mxu0
        %v808 = vsel %vm295, %v697, 0
        %810 = vmatpush.bf16.msra.mxu0 0
        %811 = vmatpush.bf16.msra.mxu0 0
        %812 = vmatpush.bf16.msra.mxu0 0
        %813 = vmatpush.bf16.msra.mxu0 0
        %814 = vmatpush.bf16.msra.mxu0 0
        %815 = vmatpush.bf16.msra.mxu0 0
        %816 = vmatpush.bf16.msra.mxu0 %v708
        %817 = vmatpush.bf16.msra.mxu0 %v707
        %818 = vmatmul.bf16.gmra.mxu0 %v808
        %v819 = vpop.f32.mrf.mxu0
        %v820 = vadd.f32 0.0, %v819
        %v821 = vpop.f32.mrf.mxu0
        %822 = vdwg.mxu0
        %v824 = vsel %vm295, %v698, 0
        %826 = vmatpush.bf16.msra.mxu0 0
        %827 = vmatpush.bf16.msra.mxu0 0
        %828 = vmatpush.bf16.msra.mxu0 0
        %829 = vmatpush.bf16.msra.mxu0 0
        %830 = vmatpush.bf16.msra.mxu0 0
        %831 = vmatpush.bf16.msra.mxu0 0
        %832 = vmatpush.bf16.msra.mxu0 %v708
        %833 = vmatpush.bf16.msra.mxu0 %v707
        %834 = vmatmul.bf16.gmra.mxu0 %v824
        %v835 = vpop.f32.mrf.mxu0
        %v836 = vadd.f32 0.0, %v835
        %v837 = vpop.f32.mrf.mxu0
        %838 = vdwg.mxu0
        %v839 = vmax.f32 %v724, 0.0
        %v840 = vmax.f32 %v740, 0.0
        %v841 = vmax.f32 %v756, 0.0
        %v842 = vmax.f32 %v772, 0.0
        %v843 = vmax.f32 %v788, 0.0
        %v844 = vmax.f32 %v804, 0.0
        %v845 = vmax.f32 %v820, 0.0
        %v846 = vmax.f32 %v836, 0.0
        %v847 = vmul.f32 %v839, 0.17677669
        %v848 = vmul.f32 %v840, 0.17677669
        %v849 = vmul.f32 %v841, 0.17677669
        %v850 = vmul.f32 %v842, 0.17677669
        %v851 = vmul.f32 %v843, 0.17677669
        %v852 = vmul.f32 %v844, 0.17677669
        %v853 = vmul.f32 %v845, 0.17677669
        %v854 = vmul.f32 %v846, 0.17677669
        %v855 = vsel %vm295, %v847, 0.0
        %856 = vadd.xlane.f32.xlu0 %v855
        %v857 = vpop.xlane.xlu0 %856
        %v858 = vsel %vm295, %v848, 0.0
        %859 = vadd.xlane.f32.xlu0 %v858
        %v860 = vpop.xlane.xlu0 %859
        %v861 = vsel %vm295, %v849, 0.0
        %862 = vadd.xlane.f32.xlu0 %v861
        %v863 = vpop.xlane.xlu0 %862
        %v864 = vsel %vm295, %v850, 0.0
        %865 = vadd.xlane.f32.xlu0 %v864
        %v866 = vpop.xlane.xlu0 %865
        %v867 = vsel %vm295, %v851, 0.0
        %868 = vadd.xlane.f32.xlu0 %v867
        %v869 = vpop.xlane.xlu0 %868
        %v870 = vsel %vm295, %v852, 0.0
        %871 = vadd.xlane.f32.xlu0 %v870
        %v872 = vpop.xlane.xlu0 %871
        %v873 = vsel %vm295, %v853, 0.0
        %874 = vadd.xlane.f32.xlu0 %v873
        %v875 = vpop.xlane.xlu0 %874
        %v876 = vsel %vm295, %v854, 0.0
        %877 = vadd.xlane.f32.xlu0 %v876
        %v878 = vpop.xlane.xlu0 %877
        %v879 = vrcp.pop 32.0
        %v880 = vmul.f32 32.0, %v879
        %v881 = vsub.f32 1.0, %v880
        %v882 = vmul.f32 %v879, %v881
        %v883 = vadd.f32 %v879, %v882
        %vm884 = vweird.f32 %v879
        %v885 = vsel %vm884, %v879, %v883
        %v886 = vmul.f32 %v857, %v885
        %v887 = vmul.f32 %v860, %v885
        %v888 = vmul.f32 %v863, %v885
        %v889 = vmul.f32 %v866, %v885
        %v890 = vmul.f32 %v869, %v885
        %v891 = vmul.f32 %v872, %v885
        %v892 = vmul.f32 %v875, %v885
        %v893 = vmul.f32 %v878, %v885
        %v894 = vsub.f32 %v847, %v886
        %v895 = vsub.f32 %v848, %v887
        %v896 = vsub.f32 %v849, %v888
        %v897 = vsub.f32 %v850, %v889
        %v898 = vsub.f32 %v851, %v890
        %v899 = vsub.f32 %v852, %v891
        %v900 = vsub.f32 %v853, %v892
        %v901 = vsub.f32 %v854, %v893
        %v902 = vmul.f32 %v894, %v894
        %v903 = vmul.f32 %v895, %v895
        %v904 = vmul.f32 %v896, %v896
        %v905 = vmul.f32 %v897, %v897
        %v906 = vmul.f32 %v898, %v898
        %v907 = vmul.f32 %v899, %v899
        %v908 = vmul.f32 %v900, %v900
        %v909 = vmul.f32 %v901, %v901
        %v910 = vsel %vm295, %v902, 0.0
        %911 = vadd.xlane.f32.xlu0 %v910
        %v912 = vpop.xlane.xlu0 %911
        %v913 = vsel %vm295, %v903, 0.0
        %914 = vadd.xlane.f32.xlu0 %v913
        %v915 = vpop.xlane.xlu0 %914
        %v916 = vsel %vm295, %v904, 0.0
        %917 = vadd.xlane.f32.xlu0 %v916
        %v918 = vpop.xlane.xlu0 %917
        %v919 = vsel %vm295, %v905, 0.0
        %920 = vadd.xlane.f32.xlu0 %v919
        %v921 = vpop.xlane.xlu0 %920
        %v922 = vsel %vm295, %v906, 0.0
        %923 = vadd.xlane.f32.xlu0 %v922
        %v924 = vpop.xlane.xlu0 %923
        %v925 = vsel %vm295, %v907, 0.0
        %926 = vadd.xlane.f32.xlu0 %v925
        %v927 = vpop.xlane.xlu0 %926
        %v928 = vsel %vm295, %v908, 0.0
        %929 = vadd.xlane.f32.xlu0 %v928
        %v930 = vpop.xlane.xlu0 %929
        %v931 = vsel %vm295, %v909, 0.0
        %932 = vadd.xlane.f32.xlu0 %v931
        %v933 = vpop.xlane.xlu0 %932
        %v934 = vmul.f32 %v912, %v885
        %v935 = vmul.f32 %v915, %v885
        %v936 = vmul.f32 %v918, %v885
        %v937 = vmul.f32 %v921, %v885
        %v938 = vmul.f32 %v924, %v885
        %v939 = vmul.f32 %v927, %v885
        %v940 = vmul.f32 %v930, %v885
        %v941 = vmul.f32 %v933, %v885
        %v942 = vadd.f32 %v934, 1e-05
        %v943 = vadd.f32 %v935, 1e-05
        %v944 = vadd.f32 %v936, 1e-05
        %v945 = vadd.f32 %v937, 1e-05
        %v946 = vadd.f32 %v938, 1e-05
        %v947 = vadd.f32 %v939, 1e-05
        %v948 = vadd.f32 %v940, 1e-05
        %v949 = vadd.f32 %v941, 1e-05
        %v950 = vrsqrt.pop %v942
        %v951 = vmul.f32 %v950, %v942
        %v952 = vmul.f32 %v951, %v950
        %v953 = vmul.f32 0.5, %v952
        %v954 = vsub.f32 1.5, %v953
        %v955 = vmul.f32 %v950, %v954
        %vm956 = vweird.f32 %v942
        %vm957 = vweird.f32 %v950
        %vm958 = vmor %vm956, %vm957
        %v959 = vsel %vm958, %v950, %v955
        %v960 = vrsqrt.pop %v943
        %v961 = vmul.f32 %v960, %v943
        %v962 = vmul.f32 %v961, %v960
        %v963 = vmul.f32 0.5, %v962
        %v964 = vsub.f32 1.5, %v963
        %v965 = vmul.f32 %v960, %v964
        %vm966 = vweird.f32 %v943
        %vm967 = vweird.f32 %v960
        %vm968 = vmor %vm966, %vm967
        %v969 = vsel %vm968, %v960, %v965
        %v970 = vrsqrt.pop %v944
        %v971 = vmul.f32 %v970, %v944
        %v972 = vmul.f32 %v971, %v970
        %v973 = vmul.f32 0.5, %v972
        %v974 = vsub.f32 1.5, %v973
        %v975 = vmul.f32 %v970, %v974
        %vm976 = vweird.f32 %v944
        %vm977 = vweird.f32 %v970
        %vm978 = vmor %vm976, %vm977
        %v979 = vsel %vm978, %v970, %v975
        %v980 = vrsqrt.pop %v945
        %v981 = vmul.f32 %v980, %v945
        %v982 = vmul.f32 %v981, %v980
        %v983 = vmul.f32 0.5, %v982
        %v984 = vsub.f32 1.5, %v983
        %v985 = vmul.f32 %v980, %v984
        %vm986 = vweird.f32 %v945
        %vm987 = vweird.f32 %v980
        %vm988 = vmor %vm986, %vm987
        %v989 = vsel %vm988, %v980, %v985
        %v990 = vrsqrt.pop %v946
        %v991 = vmul.f32 %v990, %v946
        %v992 = vmul.f32 %v991, %v990
        %v993 = vmul.f32 0.5, %v992
        %v994 = vsub.f32 1.5, %v993
        %v995 = vmul.f32 %v990, %v994
        %vm996 = vweird.f32 %v946
        %vm997 = vweird.f32 %v990
        %vm998 = vmor %vm996, %vm997
        %v999 = vsel %vm998, %v990, %v995
        %v1000 = vrsqrt.pop %v947
        %v1001 = vmul.f32 %v1000, %v947
        %v1002 = vmul.f32 %v1001, %v1000
        %v1003 = vmul.f32 0.5, %v1002
        %v1004 = vsub.f32 1.5, %v1003
        %v1005 = vmul.f32 %v1000, %v1004
        %vm1006 = vweird.f32 %v947
        %vm1007 = vweird.f32 %v1000
        %vm1008 = vmor %vm1006, %vm1007
        %v1009 = vsel %vm1008, %v1000, %v1005
        %v1010 = vrsqrt.pop %v948
        %v1011 = vmul.f32 %v1010, %v948
        %v1012 = vmul.f32 %v1011, %v1010
        %v1013 = vmul.f32 0.5, %v1012
        %v1014 = vsub.f32 1.5, %v1013
        %v1015 = vmul.f32 %v1010, %v1014
        %vm1016 = vweird.f32 %v948
        %vm1017 = vweird.f32 %v1010
        %vm1018 = vmor %vm1016, %vm1017
        %v1019 = vsel %vm1018, %v1010, %v1015
        %v1020 = vrsqrt.pop %v949
        %v1021 = vmul.f32 %v1020, %v949
        %v1022 = vmul.f32 %v1021, %v1020
        %v1023 = vmul.f32 0.5, %v1022
        %v1024 = vsub.f32 1.5, %v1023
        %v1025 = vmul.f32 %v1020, %v1024
        %vm1026 = vweird.f32 %v949
        %vm1027 = vweird.f32 %v1020
        %vm1028 = vmor %vm1026, %vm1027
        %v1029 = vsel %vm1028, %v1020, %v1025
        %v1030 = vmul.f32 %v894, %v959
        %v1031 = vmul.f32 %v895, %v969
        %v1032 = vmul.f32 %v896, %v979
        %v1033 = vmul.f32 %v897, %v989
        %v1034 = vmul.f32 %v898, %v999
        %v1035 = vmul.f32 %v899, %v1009
        %v1036 = vmul.f32 %v900, %v1019
        %v1037 = vmul.f32 %v901, %v1029
        %v1038 = vld [vmem:[%s3] sm:$0x1]
        %v1040 = vperm.slane %v1038, 0
        %v1042 = vmul.f32 %v1030, %v1040
        %v1043 = vmul.f32 %v1031, %v1040
        %v1044 = vmul.f32 %v1032, %v1040
        %v1045 = vmul.f32 %v1033, %v1040
        %v1046 = vmul.f32 %v1034, %v1040
        %v1047 = vmul.f32 %v1035, %v1040
        %v1048 = vmul.f32 %v1036, %v1040
        %v1049 = vmul.f32 %v1037, %v1040
        %v1050 = vld [vmem:[%s4] sm:$0x1]
        %v1052 = vperm.slane %v1050, 0
        %v1054 = vadd.f32 %v1042, %v1052
        %v1055 = vadd.f32 %v1043, %v1052
        %v1056 = vadd.f32 %v1044, %v1052
        %v1057 = vadd.f32 %v1045, %v1052
        %v1058 = vadd.f32 %v1046, %v1052
        %v1059 = vadd.f32 %v1047, %v1052
        %v1060 = vadd.f32 %v1048, %v1052
        %v1061 = vadd.f32 %v1049, %v1052
        %v1062 = vadd.f32 %v1054, %v279
        %v1063 = vadd.f32 %v1055, %v280
        %v1064 = vadd.f32 %v1056, %v281
        %v1065 = vadd.f32 %v1057, %v282
        %v1066 = vadd.f32 %v1058, %v283
        %v1067 = vadd.f32 %v1059, %v284
        %v1068 = vadd.f32 %v1060, %v285
        %v1069 = vadd.f32 %v1061, %v286
        %1070 = vst.msk [vmem:[%s275] sm:$0xff] %vm295, %v1062
        %1071 = vst.msk [vmem:[%s275 + $0x8] sm:$0xff] %vm295, %v1063
        %1072 = vst.msk [vmem:[%s275 + $0x10] sm:$0xff] %vm295, %v1064
        %1073 = vst.msk [vmem:[%s275 + $0x18] sm:$0xff] %vm295, %v1065
        %1074 = vst.msk [vmem:[%s275 + $0x20] sm:$0xff] %vm295, %v1066
        %1075 = vst.msk [vmem:[%s275 + $0x28] sm:$0xff] %vm295, %v1067
        %1076 = vst.msk [vmem:[%s275 + $0x30] sm:$0xff] %vm295, %v1068
        %1077 = vst.msk [vmem:[%s275 + $0x38] sm:$0xff] %vm295, %v1069
        %s1078 = sand.u32 %s141, 1
        %s1079 = scalar_lea.sflag [#allocation4], %s1078
        %s1080 = sand.u32 %s141, 1
        %s1081 = smul.addr %s1080, 64
        %s1082 = scalar_lea.vmem [#allocation8], %s1081
        // Predicated region
        $region53: #{sdgcn_forward.1} parent=39 // pred_check
          %p1083 = pneg %p151
        $region54: #{sdgcn_forward.1} parent=39 // pred_check_branch
          %1085 = sbr.rel (%p1083) target = $region56
        $region55: #{sdgcn_forward.1} parent=39 // pred_region
          %s1086 = smul.u32 8, %s23
          %1088 = vsyncadd %s1079, 0
          %s1089 = smul.addr %s1086, 8
          %s1090 = scalar_lea.hbm %s5, %s1089
          %s1091 = sshll.u32 %s1082, 4
          %s1092 = int_to_ptr.vmem [resolvable:$true] %s1091
          %s1093 = sshll.u32 %s1090, 4
          %s1094 = int_to_ptr.hbm [resolvable:$true] %s1093
          %1099 = dma.vmem_to_hbm [thread:$0]  %s1092, 1024, %s1094, %s1079, 128, 128, 8
        $region56: #{sdgcn_forward.1} parent=39 // pred_fallthru
          _
      $region40: #{sdgcn_forward.1} parent=5 // pred_fallthru
        _
      %p1100 = scmp.le.s32.totalorder 2, %s18
      // Predicated region
      $region57: #{sdgcn_forward.1} parent=5 // pred_check
        %p1101 = pneg %p1100
      $region58: #{sdgcn_forward.1} parent=5 // pred_check_branch
        %1103 = sbr.rel (%p1101) target = $region60
      $region59: #{sdgcn_forward.1} parent=5 // pred_region
        %s1104 = ssub.s32 %s18, 2
        // Predicated region
        $region61: #{sdgcn_forward.1} parent=59 // pred_check
          %p1105 = pneg %p157
        $region62: #{sdgcn_forward.1} parent=59 // pred_check_branch
          %1107 = sbr.rel (%p1105) target = $region64
        $region63: #{sdgcn_forward.1} parent=59 // pred_region
          %s1108 = sand.u32 %s142, 1
          %s1109 = scalar_lea.sflag [#allocation4], %s1108
          %s1110 = sand.u32 %s142, 1
          %s1111 = smul.addr %s1110, 64
          %s1112 = scalar_lea.vmem [#allocation8], %s1111
          %1114 = dma.done %s1109, 1024
        $region64: #{sdgcn_forward.1} parent=59 // pred_fallthru
          _
      $region60: #{sdgcn_forward.1} parent=5 // pred_fallthru
        _
    $region6: #{sdgcn_forward.1} parent=1 // loop_footer
      %s22 = sadd.s32 1, %s18
    $region7: #{sdgcn_forward.1} parent=1 // loop_footer_branch
      %17 = sbr.rel target = $region3
    $region8: #{sdgcn_forward.1} parent=1 // loop_exit
      _
    %1115 = vsyncpa [#allocation3], 1
    %s1116 = scalar_lea.sflag [#allocation3], 1
    %1117 = vsyncpa %s1116, 1
    %1118 = vsyncpa [#allocation6], 1
    %1119 = vsyncpa [#allocation4], 1
    %s1120 = scalar_lea.sflag [#allocation4], 1
    %1121 = vsyncpa %s1120, 1

</llo_original>
